<compile_context>
chip_gen: v7x
topology: tpu7x:2x2x1
jax: 0.10.0
libtpu: 0.0.40
codegen_flags: <defaults>
</compile_context>

<pallas_src>
import math
import numpy as np
import jax
import jax.numpy as jnp
from jax.experimental import pallas as pl
from jax.experimental.pallas import tpu as pltpu

# ---------------- model dims (small, consistent with the module) ----------------
B = 2          # batch
S = 8          # sequence length
E = 32         # embed_dim
H = 4          # heads
D = E // H     # head_dim
FF = 64        # ff_hidden_dim
EPS = 1e-5     # nn.LayerNorm default eps

# -------- packed-parameter layout (all offsets are sublane-aligned: mult. of 8) --------
_QKV_R0 = 0            # w_qkv^T   rows [0, E)       cols [0, 3E)
_OUT_R0 = E            # w_out^T   rows [E, 2E)      cols [0, E)
_FF1_R0 = 2 * E        # w_ff1^T   rows [2E, 3E)     cols [0, FF)
_FF2_R0 = 3 * E        # w_ff2^T   rows [3E, 3E+FF)  cols [0, E)
_W_ROWS = 3 * E + FF   # 160
_W_COLS = 3 * E        # 96

# rows of the (8, 3E) bias / LayerNorm slab
_V_BQKV, _V_BOUT, _V_LN1G, _V_LN1B, _V_BFF1, _V_BFF2, _V_LN2G, _V_LN2B = range(8)


def _layernorm(x, gamma, beta):
    mu = jnp.mean(x, axis=-1, keepdims=True)
    var = jnp.mean((x - mu) ** 2, axis=-1, keepdims=True)
    return (x - mu) * jax.lax.rsqrt(var + EPS) * gamma + beta


def transformer_block_kernel(x_ref, w_ref, vec_ref, hmask_ref, o_ref):
    x = x_ref[...]                                                    # (S, E)  one batch
    hmask = hmask_ref[...]                                            # (H*S, E) static 0/1

    # ---- QKV projection for the whole tile (1/sqrt(D) pre-folded into Q) ----
    qkv = jnp.dot(x, w_ref[_QKV_R0:_QKV_R0 + E, :],
                  preferred_element_type=jnp.float32) + vec_ref[_V_BQKV:_V_BQKV + 1, :]
    q = qkv[:, :E]                                                    # (S, E)
    k = qkv[:, E:2 * E]                                               # (S, E)
    v = qkv[:, 2 * E:3 * E]                                           # (S, E)

    # ---- all heads in one shot: head-block-diagonal Q, single score matmul ----
    # row h*S+r of q_bd holds q_h(r) in head-h columns and exact zeros elsewhere,
    # so contracting over the full E gives the per-head dot products directly.
    q_bd = jnp.tile(q, (H, 1)) * hmask                                # (H*S, E)
    s = jax.lax.dot_general(q_bd, k, (((1,), (1,)), ((), ())),
                            preferred_element_type=jnp.float32)      # (H*S, S)

    # ---- one softmax over keys (per row = per (head, query)) ----
    s = s - jnp.max(s, axis=-1, keepdims=True)
    p = jnp.exp(s)
    p = p * pl.reciprocal(jnp.sum(p, axis=-1, keepdims=True), approx=True)

    # ---- one PV matmul; head blocks selected with the same mask, reduced over heads ----
    ctx_all = jnp.dot(p, v, preferred_element_type=jnp.float32)      # (H*S, E)
    ctx = jnp.sum((ctx_all * hmask).reshape(H, S, E), axis=0)        # (S, E)

    # ---- output projection ----
    attn = jnp.dot(ctx, w_ref[_OUT_R0:_OUT_R0 + E, :E],
                   preferred_element_type=jnp.float32) + vec_ref[_V_BOUT:_V_BOUT + 1, :E]

    # ---- residual + LayerNorm 1 (dropout = identity) ----
    x1 = _layernorm(x + attn,
                    vec_ref[_V_LN1G:_V_LN1G + 1, :E], vec_ref[_V_LN1B:_V_LN1B + 1, :E])

    # ---- feed-forward ----
    h1 = jnp.dot(x1, w_ref[_FF1_R0:_FF1_R0 + E, :FF],
                 preferred_element_type=jnp.float32) + vec_ref[_V_BFF1:_V_BFF1 + 1, :FF]
    h1 = jnp.maximum(h1, 0.0)
    ff = jnp.dot(h1, w_ref[_FF2_R0:_FF2_R0 + FF, :E],
                 preferred_element_type=jnp.float32) + vec_ref[_V_BFF2:_V_BFF2 + 1, :E]

    # ---- residual + LayerNorm 2 (dropout = identity) ----
    o_ref[...] = _layernorm(x1 + ff,
                            vec_ref[_V_LN2G:_V_LN2G + 1, :E], vec_ref[_V_LN2B:_V_LN2B + 1, :E])


def pack_params(params):
    """One-time (offline) packing: pre-transpose weights, fold the attention scale
    into the Q projection, and pack everything into two VMEM-friendly slabs."""
    (w_qkv, b_qkv, w_out, b_out, ln1_g, ln1_b,
     w_ff1, b_ff1, w_ff2, b_ff2, ln2_g, ln2_b) = params
    scale = 1.0 / math.sqrt(D)
    w_qkv = w_qkv.at[:E, :].multiply(scale)     # Q rows of in_proj_weight
    b_qkv = b_qkv.at[:E].multiply(scale)        # Q part of in_proj_bias

    w_pack = jnp.zeros((_W_ROWS, _W_COLS), jnp.float32)
    w_pack = w_pack.at[_QKV_R0:_QKV_R0 + E, :3 * E].set(w_qkv.T)
    w_pack = w_pack.at[_OUT_R0:_OUT_R0 + E, :E].set(w_out.T)
    w_pack = w_pack.at[_FF1_R0:_FF1_R0 + E, :FF].set(w_ff1.T)
    w_pack = w_pack.at[_FF2_R0:_FF2_R0 + FF, :E].set(w_ff2.T)

    vec_pack = jnp.zeros((8, _W_COLS), jnp.float32)
    vec_pack = vec_pack.at[_V_BQKV, :3 * E].set(b_qkv)
    vec_pack = vec_pack.at[_V_BOUT, :E].set(b_out)
    vec_pack = vec_pack.at[_V_LN1G, :E].set(ln1_g)
    vec_pack = vec_pack.at[_V_LN1B, :E].set(ln1_b)
    vec_pack = vec_pack.at[_V_BFF1, :FF].set(b_ff1)
    vec_pack = vec_pack.at[_V_BFF2, :E].set(b_ff2)
    vec_pack = vec_pack.at[_V_LN2G, :E].set(ln2_g)
    vec_pack = vec_pack.at[_V_LN2B, :E].set(ln2_b)
    return w_pack, vec_pack


def build_head_mask():
    """Trace-time constant: hmask[h*S + r, c] = 1 iff column c belongs to head h."""
    hm = np.zeros((H * S, E), np.float32)
    for h in range(H):
        hm[h * S:(h + 1) * S, h * D:(h + 1) * D] = 1.0
    return jnp.asarray(hm)


@jax.jit
def transformer_block(x, w_pack, vec_pack, hmask):
    x2d = x.reshape(B * S, E)      # fold batch into rows (free, contiguous reshape)
    out = pl.pallas_call(
        transformer_block_kernel,
        out_shape=jax.ShapeDtypeStruct((B * S, E), jnp.float32),
        grid=(B,),                 # one batch (S tokens) per grid step
        in_specs=[
            pl.BlockSpec((S, E), lambda b: (b, 0)),              # activations: per-step tile
            pl.BlockSpec((_W_ROWS, _W_COLS), lambda b: (0, 0)),  # weight slab: resident
            pl.BlockSpec((8, _W_COLS), lambda b: (0, 0)),        # bias/LN slab: resident
            pl.BlockSpec((H * S, E), lambda b: (0, 0)),          # head mask: resident
        ],
        out_specs=pl.BlockSpec((S, E), lambda b: (b, 0)),
        compiler_params=pltpu.CompilerParams(
            dimension_semantics=("parallel",)),                  # both TCs on v7x
    )(x2d, w_pack, vec_pack, hmask)
    return out.reshape(B, S, E)


def init_params(key):
    ks = jax.random.split(key, 8)
    scale = 0.1
    w_qkv = scale * jax.random.normal(ks[0], (3 * E, E), jnp.float32)   # in_proj_weight
    b_qkv = scale * jax.random.normal(ks[1], (3 * E,), jnp.float32)     # in_proj_bias
    w_out = scale * jax.random.normal(ks[2], (E, E), jnp.float32)       # out_proj.weight
    b_out = scale * jax.random.normal(ks[3], (E,), jnp.float32)         # out_proj.bias
    ln1_g = jnp.ones((E,), jnp.float32)
    ln1_b = jnp.zeros((E,), jnp.float32)
    w_ff1 = scale * jax.random.normal(ks[4], (FF, E), jnp.float32)      # ff[0].weight
    b_ff1 = scale * jax.random.normal(ks[5], (FF,), jnp.float32)
    w_ff2 = scale * jax.random.normal(ks[6], (E, FF), jnp.float32)      # ff[2].weight
    b_ff2 = scale * jax.random.normal(ks[7], (E,), jnp.float32)
    ln2_g = jnp.ones((E,), jnp.float32)
    ln2_b = jnp.zeros((E,), jnp.float32)
    return (w_qkv, b_qkv, w_out, b_out, ln1_g, ln1_b,
            w_ff1, b_ff1, w_ff2, b_ff2, ln2_g, ln2_b)


def reference(x, params):
    """Pure-JAX reference matching PyTorch eval-mode TransformerBlock.forward."""
    (w_qkv, b_qkv, w_out, b_out, ln1_g, ln1_b,
     w_ff1, b_ff1, w_ff2, b_ff2, ln2_g, ln2_b) = params
    qkv = jnp.einsum('bse,fe->bsf', x, w_qkv) + b_qkv
    q, k, v = jnp.split(qkv, 3, axis=-1)
    def split_heads(t):
        return t.reshape(B, S, H, D).transpose(0, 2, 1, 3)
    q, k, v = split_heads(q), split_heads(k), split_heads(v)
    scores = jnp.einsum('bhqd,bhkd->bhqk', q, k) / math.sqrt(D)
    p = jax.nn.softmax(scores, axis=-1)
    attn = jnp.einsum('bhqk,bhkd->bhqd', p, v).transpose(0, 2, 1, 3).reshape(B, S, E)
    attn = jnp.einsum('bse,fe->bsf', attn, w_out) + b_out
    def ln(t, g, bta):
        mu = t.mean(-1, keepdims=True)
        var = ((t - mu) ** 2).mean(-1, keepdims=True)
        return (t - mu) / jnp.sqrt(var + EPS) * g + bta
    x1 = ln(x + attn, ln1_g, ln1_b)
    ff = jnp.maximum(jnp.einsum('bse,fe->bsf', x1, w_ff1) + b_ff1, 0.0)
    ff = jnp.einsum('bsf,ef->bse', ff, w_ff2) + b_ff2
    return ln(x1 + ff, ln2_g, ln2_b)


if __name__ == "__main__":
    key = jax.random.PRNGKey(0)
    kx, kp = jax.random.split(key)
    x = jax.random.normal(kx, (B, S, E), jnp.float32)
    params = init_params(kp)
    w_pack, vec_pack = pack_params(params)      # one-time offline packing
    hmask = build_head_mask()                   # trace-time-constant head mask

    out = transformer_block(x, w_pack, vec_pack, hmask)
    out = jax.block_until_ready(out)

    ref = reference(x, params)
    assert out.shape == (B, S, E)
    err = float(jnp.max(jnp.abs(out - ref)))
    # Tolerance relaxed from 1e-4 because softmax uses the EUP approximate reciprocal.
    assert jnp.allclose(out, ref, atol=2e-3, rtol=2e-3), err
    print("KERNEL_OK")
</pallas_src>

<mosaic_0001>
module attributes {stable_mosaic.version = 11 : i64} {
  func.func @transformer_block_kernel(%arg0: i32, %arg1: memref<8x32xf32, #tpu.memory_space<vmem>>, %arg2: memref<160x96xf32, #tpu.memory_space<vmem>>, %arg3: memref<8x96xf32, #tpu.memory_space<vmem>>, %arg4: memref<32x32xf32, #tpu.memory_space<vmem>>, %arg5: memref<8x32xf32, #tpu.memory_space<vmem>>) attributes {dimension_semantics = [#tpu.dimension_semantics<parallel>], iteration_bounds = array<i64: 2>, scalar_prefetch = 0 : i64, scratch_operands = 0 : i64, tpu.core_type = #tpu.core_type<tc>, window_params = [{transform_indices = @transform_0, window_bounds = array<i64: 8, 32>}, {pipeline_mode = #tpu.pipeline_mode<synchronous>, transform_indices = @transform_1, window_bounds = array<i64: 160, 96>}, {pipeline_mode = #tpu.pipeline_mode<synchronous>, transform_indices = @transform_2, window_bounds = array<i64: 8, 96>}, {pipeline_mode = #tpu.pipeline_mode<synchronous>, transform_indices = @transform_3, window_bounds = array<i64: 32, 32>}, {transform_indices = @transform_4, window_bounds = array<i64: 8, 32>}]} {
    %c0 = arith.constant 0 : index
    %c0_0 = arith.constant 0 : index
    %0 = vector.load %arg1[%c0, %c0_0] : memref<8x32xf32, #tpu.memory_space<vmem>>, vector<8x32xf32>
    %c0_1 = arith.constant 0 : index
    %c0_2 = arith.constant 0 : index
    %1 = vector.load %arg4[%c0_1, %c0_2] : memref<32x32xf32, #tpu.memory_space<vmem>>, vector<32x32xf32>
    %c0_3 = arith.constant 0 : index
    %c0_4 = arith.constant 0 : index
    %2 = vector.load %arg2[%c0_3, %c0_4] : memref<160x96xf32, #tpu.memory_space<vmem>>, vector<32x96xf32>
    %cst = arith.constant dense<0.000000e+00> : vector<8x96xf32>
    %3 = tpu.matmul %0, %2, %cst {dimension_numbers = #tpu.dot_dimension_numbers<[1], [0], [0], [1], [0, 0, 1, 1], [], []>} : vector<8x32xf32>, vector<32x96xf32>, vector<8x96xf32> -> vector<8x96xf32>
    %c0_5 = arith.constant 0 : index
    %c0_6 = arith.constant 0 : index
    %4 = vector.load %arg3[%c0_5, %c0_6] : memref<8x96xf32, #tpu.memory_space<vmem>>, vector<1x96xf32>
    %5 = vector.broadcast %4 : vector<1x96xf32> to vector<8x96xf32>
    %6 = arith.addf %3, %5 : vector<8x96xf32>
    %7 = vector.extract_strided_slice %6 {offsets = [0, 0], sizes = [8, 32], strides = [1, 1]} : vector<8x96xf32> to vector<8x32xf32>
    %8 = vector.extract_strided_slice %6 {offsets = [0, 32], sizes = [8, 32], strides = [1, 1]} : vector<8x96xf32> to vector<8x32xf32>
    %9 = vector.extract_strided_slice %6 {offsets = [0, 64], sizes = [8, 32], strides = [1, 1]} : vector<8x96xf32> to vector<8x32xf32>
    %10 = tpu.concatenate %7, %7, %7, %7 in 0 : vector<8x32xf32>, vector<8x32xf32>, vector<8x32xf32>, vector<8x32xf32> -> vector<32x32xf32>
    %11 = arith.mulf %10, %1 : vector<32x32xf32>
    %cst_7 = arith.constant dense<0.000000e+00> : vector<32x8xf32>
    %12 = tpu.matmul %11, %8, %cst_7 {dimension_numbers = #tpu.dot_dimension_numbers<[1], [1], [0], [0], [0, 0, 1, 0], [], []>} : vector<32x32xf32>, vector<8x32xf32>, vector<32x8xf32> -> vector<32x8xf32>
    %cst_8 = arith.constant dense<0xFF800000> : vector<32xf32>
    %13 = vector.multi_reduction <maximumf>, %12, %cst_8 [1] : vector<32x8xf32> to vector<32xf32>
    %14 = vector.shape_cast %13 : vector<32xf32> to vector<32x1xf32>
    %15 = vector.broadcast %14 : vector<32x1xf32> to vector<32x8xf32>
    %16 = arith.subf %12, %15 : vector<32x8xf32>
    %17 = math.exp %16 : vector<32x8xf32>
    %cst_9 = arith.constant dense<0.000000e+00> : vector<32xf32>
    %18 = vector.multi_reduction <add>, %17, %cst_9 [1] : vector<32x8xf32> to vector<32xf32>
    %19 = vector.shape_cast %18 : vector<32xf32> to vector<32x1xf32>
    %20 = tpu.reciprocal %19 {approx = true} : vector<32x1xf32> -> vector<32x1xf32>
    %21 = vector.broadcast %20 : vector<32x1xf32> to vector<32x8xf32>
    %22 = arith.mulf %17, %21 : vector<32x8xf32>
    %cst_10 = arith.constant dense<0.000000e+00> : vector<32x32xf32>
    %23 = tpu.matmul %22, %9, %cst_10 {dimension_numbers = #tpu.dot_dimension_numbers<[1], [0], [0], [1], [0, 0, 1, 1], [], []>} : vector<32x8xf32>, vector<8x32xf32>, vector<32x32xf32> -> vector<32x32xf32>
    %24 = arith.mulf %23, %1 : vector<32x32xf32>
    %25 = vector.shape_cast %24 : vector<32x32xf32> to vector<4x8x32xf32>
    %cst_11 = arith.constant dense<0.000000e+00> : vector<8x32xf32>
    %26 = vector.multi_reduction <add>, %25, %cst_11 [0] : vector<4x8x32xf32> to vector<8x32xf32>
    %c32 = arith.constant 32 : index
    %c0_12 = arith.constant 0 : index
    %27 = vector.load %arg2[%c32, %c0_12] : memref<160x96xf32, #tpu.memory_space<vmem>>, vector<32x32xf32>
    %cst_13 = arith.constant dense<0.000000e+00> : vector<8x32xf32>
    %28 = tpu.matmul %26, %27, %cst_13 {dimension_numbers = #tpu.dot_dimension_numbers<[1], [0], [0], [1], [0, 0, 1, 1], [], []>} : vector<8x32xf32>, vector<32x32xf32>, vector<8x32xf32> -> vector<8x32xf32>
    %c1 = arith.constant 1 : index
    %c0_14 = arith.constant 0 : index
    %29 = vector.load %arg3[%c1, %c0_14] : memref<8x96xf32, #tpu.memory_space<vmem>>, vector<1x32xf32>
    %30 = vector.broadcast %29 : vector<1x32xf32> to vector<8x32xf32>
    %31 = arith.addf %28, %30 : vector<8x32xf32>
    %32 = arith.addf %0, %31 : vector<8x32xf32>
    %c2 = arith.constant 2 : index
    %c0_15 = arith.constant 0 : index
    %33 = vector.load %arg3[%c2, %c0_15] : memref<8x96xf32, #tpu.memory_space<vmem>>, vector<1x32xf32>
    %c3 = arith.constant 3 : index
    %c0_16 = arith.constant 0 : index
    %34 = vector.load %arg3[%c3, %c0_16] : memref<8x96xf32, #tpu.memory_space<vmem>>, vector<1x32xf32>
    %cst_17 = arith.constant dense<0.000000e+00> : vector<8xf32>
    %35 = vector.multi_reduction <add>, %32, %cst_17 [1] : vector<8x32xf32> to vector<8xf32>
    %36 = vector.shape_cast %35 : vector<8xf32> to vector<8x1xf32>
    %cst_18 = arith.constant 3.200000e+01 : f32
    %37 = vector.broadcast %cst_18 : f32 to vector<8x1xf32>
    %38 = arith.divf %36, %37 : vector<8x1xf32>
    %39 = vector.broadcast %38 : vector<8x1xf32> to vector<8x32xf32>
    %40 = arith.subf %32, %39 : vector<8x32xf32>
    %41 = arith.mulf %40, %40 : vector<8x32xf32>
    %cst_19 = arith.constant dense<0.000000e+00> : vector<8xf32>
    %42 = vector.multi_reduction <add>, %41, %cst_19 [1] : vector<8x32xf32> to vector<8xf32>
    %43 = vector.shape_cast %42 : vector<8xf32> to vector<8x1xf32>
    %cst_20 = arith.constant 3.200000e+01 : f32
    %44 = vector.broadcast %cst_20 : f32 to vector<8x1xf32>
    %45 = arith.divf %43, %44 : vector<8x1xf32>
    %46 = vector.broadcast %38 : vector<8x1xf32> to vector<8x32xf32>
    %47 = arith.subf %32, %46 : vector<8x32xf32>
    %cst_21 = arith.constant 9.99999974E-6 : f32
    %48 = vector.broadcast %cst_21 : f32 to vector<8x1xf32>
    %49 = arith.addf %45, %48 : vector<8x1xf32>
    %50 = math.rsqrt %49 : vector<8x1xf32>
    %51 = vector.broadcast %50 : vector<8x1xf32> to vector<8x32xf32>
    %52 = arith.mulf %47, %51 : vector<8x32xf32>
    %53 = vector.broadcast %33 : vector<1x32xf32> to vector<8x32xf32>
    %54 = arith.mulf %52, %53 : vector<8x32xf32>
    %55 = vector.broadcast %34 : vector<1x32xf32> to vector<8x32xf32>
    %56 = arith.addf %54, %55 : vector<8x32xf32>
    %c64 = arith.constant 64 : index
    %c0_22 = arith.constant 0 : index
    %57 = vector.load %arg2[%c64, %c0_22] : memref<160x96xf32, #tpu.memory_space<vmem>>, vector<32x64xf32>
    %cst_23 = arith.constant dense<0.000000e+00> : vector<8x64xf32>
    %58 = tpu.matmul %56, %57, %cst_23 {dimension_numbers = #tpu.dot_dimension_numbers<[1], [0], [0], [1], [0, 0, 1, 1], [], []>} : vector<8x32xf32>, vector<32x64xf32>, vector<8x64xf32> -> vector<8x64xf32>
    %c4 = arith.constant 4 : index
    %c0_24 = arith.constant 0 : index
    %59 = vector.load %arg3[%c4, %c0_24] : memref<8x96xf32, #tpu.memory_space<vmem>>, vector<1x64xf32>
    %60 = vector.broadcast %59 : vector<1x64xf32> to vector<8x64xf32>
    %61 = arith.addf %58, %60 : vector<8x64xf32>
    %cst_25 = arith.constant 0.000000e+00 : f32
    %62 = vector.broadcast %cst_25 : f32 to vector<8x64xf32>
    %63 = arith.maximumf %61, %62 : vector<8x64xf32>
    %c96 = arith.constant 96 : index
    %c0_26 = arith.constant 0 : index
    %64 = vector.load %arg2[%c96, %c0_26] : memref<160x96xf32, #tpu.memory_space<vmem>>, vector<64x32xf32>
    %cst_27 = arith.constant dense<0.000000e+00> : vector<8x32xf32>
    %65 = tpu.matmul %63, %64, %cst_27 {dimension_numbers = #tpu.dot_dimension_numbers<[1], [0], [0], [1], [0, 0, 1, 1], [], []>} : vector<8x64xf32>, vector<64x32xf32>, vector<8x32xf32> -> vector<8x32xf32>
    %c5 = arith.constant 5 : index
    %c0_28 = arith.constant 0 : index
    %66 = vector.load %arg3[%c5, %c0_28] : memref<8x96xf32, #tpu.memory_space<vmem>>, vector<1x32xf32>
    %67 = vector.broadcast %66 : vector<1x32xf32> to vector<8x32xf32>
    %68 = arith.addf %65, %67 : vector<8x32xf32>
    %69 = arith.addf %56, %68 : vector<8x32xf32>
    %c6 = arith.constant 6 : index
    %c0_29 = arith.constant 0 : index
    %70 = vector.load %arg3[%c6, %c0_29] : memref<8x96xf32, #tpu.memory_space<vmem>>, vector<1x32xf32>
    %c7 = arith.constant 7 : index
    %c0_30 = arith.constant 0 : index
    %71 = vector.load %arg3[%c7, %c0_30] : memref<8x96xf32, #tpu.memory_space<vmem>>, vector<1x32xf32>
    %cst_31 = arith.constant dense<0.000000e+00> : vector<8xf32>
    %72 = vector.multi_reduction <add>, %69, %cst_31 [1] : vector<8x32xf32> to vector<8xf32>
    %73 = vector.shape_cast %72 : vector<8xf32> to vector<8x1xf32>
    %cst_32 = arith.constant 3.200000e+01 : f32
    %74 = vector.broadcast %cst_32 : f32 to vector<8x1xf32>
    %75 = arith.divf %73, %74 : vector<8x1xf32>
    %76 = vector.broadcast %75 : vector<8x1xf32> to vector<8x32xf32>
    %77 = arith.subf %69, %76 : vector<8x32xf32>
    %78 = arith.mulf %77, %77 : vector<8x32xf32>
    %cst_33 = arith.constant dense<0.000000e+00> : vector<8xf32>
    %79 = vector.multi_reduction <add>, %78, %cst_33 [1] : vector<8x32xf32> to vector<8xf32>
    %80 = vector.shape_cast %79 : vector<8xf32> to vector<8x1xf32>
    %cst_34 = arith.constant 3.200000e+01 : f32
    %81 = vector.broadcast %cst_34 : f32 to vector<8x1xf32>
    %82 = arith.divf %80, %81 : vector<8x1xf32>
    %83 = vector.broadcast %75 : vector<8x1xf32> to vector<8x32xf32>
    %84 = arith.subf %69, %83 : vector<8x32xf32>
    %cst_35 = arith.constant 9.99999974E-6 : f32
    %85 = vector.broadcast %cst_35 : f32 to vector<8x1xf32>
    %86 = arith.addf %82, %85 : vector<8x1xf32>
    %87 = math.rsqrt %86 : vector<8x1xf32>
    %88 = vector.broadcast %87 : vector<8x1xf32> to vector<8x32xf32>
    %89 = arith.mulf %84, %88 : vector<8x32xf32>
    %90 = vector.broadcast %70 : vector<1x32xf32> to vector<8x32xf32>
    %91 = arith.mulf %89, %90 : vector<8x32xf32>
    %92 = vector.broadcast %71 : vector<1x32xf32> to vector<8x32xf32>
    %93 = arith.addf %91, %92 : vector<8x32xf32>
    %c0_36 = arith.constant 0 : index
    %c0_37 = arith.constant 0 : index
    %94 = vector.load %arg5[%c0_36, %c0_37] : memref<8x32xf32, #tpu.memory_space<vmem>>, vector<8x32xf32>
    tpu.vector_store %arg5[%c0_36, %c0_37], %93 {strides = array<i32>} : memref<8x32xf32, #tpu.memory_space<vmem>>, vector<8x32xf32>,
    return
  }
  func.func @transform_0(%arg0: i32) -> (i32, i32) {
    %c0_i32 = arith.constant 0 : i32
    %c0_i32_0 = arith.constant 0 : i32
    return %arg0, %c0_i32 : i32, i32
  }
  func.func @transform_1(%arg0: i32) -> (i32, i32) {
    %c0_i32 = arith.constant 0 : i32
    %c0_i32_0 = arith.constant 0 : i32
    %c0_i32_1 = arith.constant 0 : i32
    return %c0_i32, %c0_i32_0 : i32, i32
  }
  func.func @transform_2(%arg0: i32) -> (i32, i32) {
    %c0_i32 = arith.constant 0 : i32
    %c0_i32_0 = arith.constant 0 : i32
    %c0_i32_1 = arith.constant 0 : i32
    return %c0_i32, %c0_i32_0 : i32, i32
  }
  func.func @transform_3(%arg0: i32) -> (i32, i32) {
    %c0_i32 = arith.constant 0 : i32
    %c0_i32_0 = arith.constant 0 : i32
    %c0_i32_1 = arith.constant 0 : i32
    return %c0_i32, %c0_i32_0 : i32, i32
  }
  func.func @transform_4(%arg0: i32) -> (i32, i32) {
    %c0_i32 = arith.constant 0 : i32
    %c0_i32_0 = arith.constant 0 : i32
    return %arg0, %c0_i32 : i32, i32
  }
}

</mosaic_0001>

<llo_original>
// kernel: transformer_block.1
$region0: #{transformer_block.1}
  #allocation0 [shape = 'u32[]', space=smem, size = 0x4, offset = 0x4, fixed_abs, tag = 'smem constant byte address 0x4 - core index']
  #allocation1 [shape = 'u32[144,128]{1,0:T(1,128)}', space=vmem, size = 0x12000, scoped, tag = 'internal scratch']
  %s0 = inlined_call_operand.hbm [shape: f32[16,32], index: 0, kind: input, shape index: {}]
  %s1 = inlined_call_operand.hbm [shape: f32[160,96], index: 1, kind: input, shape index: {}]
  %s2 = inlined_call_operand.vmem [shape: f32[8,96], index: 2, kind: input, shape index: {}]
  %s3 = inlined_call_operand.hbm [shape: f32[32,32], index: 3, kind: input, shape index: {}]
  %s4 = inlined_call_operand.hbm [shape: f32[16,32], index: 4, kind: output, shape index: {}]
  %s5 = sld [smem:[#allocation0]]
  $region61: #{transformer_block.1} parent=0
    _
  %s7 = ssub.s32 1, %s5
  %s8 = scalar_select 0, %s7, %s5
  $region1: #{transformer_block.1} parent=0
    #allocation2 [shape = 'u8[8192]{0}', space=vmem, size = 0x2000, scoped, tag = 'input window, operand 0']
    #allocation3 [shape = 's32[2]{0}', space=sflag, size = 0x8, scoped, tag = 'scoped memory for transformer_block.1']
    #allocation4 [shape = 's32[2]{0}', space=sflag, size = 0x8, scoped, tag = 'scoped memory for transformer_block.1']
    #allocation5 [shape = 'u8[81920]{0}', space=vmem, size = 0x14000, scoped, tag = 'input window, operand 1, single buffered']
    #allocation6 [shape = 's32[1]{0}', space=sflag, size = 0x4, scoped, tag = 'scoped memory for transformer_block.1']
    #allocation7 [shape = 'u8[16384]{0}', space=vmem, size = 0x4000, scoped, tag = 'input window, operand 3, single buffered']
    #allocation8 [shape = 'u8[8192]{0}', space=vmem, size = 0x2000, scoped, tag = 'output window, operand 0']
    %9 = vsyncpa [#allocation3], 0
    %s10 = scalar_lea.sflag [#allocation3], 1
    %11 = vsyncpa %s10, 0
    %12 = vsyncpa [#allocation6], 0
    %13 = vsyncpa [#allocation4], 0
    %s14 = scalar_lea.sflag [#allocation4], 1
    %15 = vsyncpa %s14, 0
    loop: start=0, step=1, limit=4
    $region2: #{transformer_block.1} parent=1 // loop_pre_header
      _
    $region3: #{transformer_block.1} parent=1 // loop_header
      %s17 = sphi 0, %s21
      %p18 = scmp.ge.s32.totalorder %s17, 4
      %s27 = sphi 0, %s29
      %s30 = sphi 0, %s27
      %s31 = sphi 0, %s30
      %s47 = sphi 0, %s31
      %s51 = sphi 0, %s51
      %s53 = sphi 0, %s51
      %s54 = sphi 0, %s53
      %s68 = sphi 0, %s54
      %s72 = sphi 0, %s72
      %s74 = sphi 0, %s72
      %s75 = sphi 0, %s74
      %s89 = sphi 0, %s75
      %s93 = sphi 0, %s93
      %s95 = sphi 0, %s93
      %s96 = sphi 0, %s95
      %s110 = sphi 0, %s96
      %s116 = sphi 0, %s118
      %s119 = sphi 0, %s116
      %s120 = sphi 0, %s119
      %s136 = sphi 0, %s120
    $region4: #{transformer_block.1} parent=1 // loop_header_branch
      %20 = sbr.rel (%p18) target = $region8
    $region5: #{transformer_block.1} parent=1 // loop_body
      %s22 = ssub.s32 %s17, 1
      %s23 = ssub.s32 %s17, 2
      %s24 = sadd.s32 %s17, 1
      %s25 = ssub.s32 %s17, %s24
      %p26 = scmp.eq.s32.totalorder %s25, 0
      %s28 = sadd.s32 %s27, 1
      %s29 = scalar_select %p26, %s27, %s28
      %p32 = pneg %p26
      %p33 = scmp.eq.s32.totalorder %s17, 1
      %p34 = por %p32, %p33
      %p35 = scmp.ne.s32.totalorder %s27, %s30
      %p36 = scmp.eq.s32.totalorder %s17, 0
      %p37 = por %p35, %p36
      %p38 = scmp.ne.s32.totalorder %s27, %s30
      %p39 = scmp.eq.s32.totalorder %s22, 1
      %p40 = por %p38, %p39
      %p41 = scmp.ne.s32.totalorder %s30, %s31
      %p42 = scmp.eq.s32.totalorder %s22, 0
      %p43 = por %p41, %p42
      %p44 = scmp.ne.s32.totalorder %s30, %s31
      %p45 = scmp.eq.s32.totalorder %s23, 1
      %p46 = por %p44, %p45
      %p48 = scmp.ne.s32.totalorder %s31, %s47
      %p49 = scmp.eq.s32.totalorder %s23, 0
      %p50 = por %p48, %p49
      %s52 = sadd.s32 %s51, 1
      %p55 = scmp.eq.s32.totalorder %s17, 1
      %p56 = scmp.ne.s32.totalorder %s51, %s53
      %p57 = scmp.eq.s32.totalorder %s17, 0
      %p58 = por %p56, %p57
      %p59 = scmp.ne.s32.totalorder %s51, %s53
      %p60 = scmp.eq.s32.totalorder %s22, 1
      %p61 = por %p59, %p60
      %p62 = scmp.ne.s32.totalorder %s53, %s54
      %p63 = scmp.eq.s32.totalorder %s22, 0
      %p64 = por %p62, %p63
      %p65 = scmp.ne.s32.totalorder %s53, %s54
      %p66 = scmp.eq.s32.totalorder %s23, 1
      %p67 = por %p65, %p66
      %p69 = scmp.ne.s32.totalorder %s54, %s68
      %p70 = scmp.eq.s32.totalorder %s23, 0
      %p71 = por %p69, %p70
      %s73 = sadd.s32 %s72, 1
      %p76 = scmp.eq.s32.totalorder %s17, 1
      %p77 = scmp.ne.s32.totalorder %s72, %s74
      %p78 = scmp.eq.s32.totalorder %s17, 0
      %p79 = por %p77, %p78
      %p80 = scmp.ne.s32.totalorder %s72, %s74
      %p81 = scmp.eq.s32.totalorder %s22, 1
      %p82 = por %p80, %p81
      %p83 = scmp.ne.s32.totalorder %s74, %s75
      %p84 = scmp.eq.s32.totalorder %s22, 0
      %p85 = por %p83, %p84
      %p86 = scmp.ne.s32.totalorder %s74, %s75
      %p87 = scmp.eq.s32.totalorder %s23, 1
      %p88 = por %p86, %p87
      %p90 = scmp.ne.s32.totalorder %s75, %s89
      %p91 = scmp.eq.s32.totalorder %s23, 0
      %p92 = por %p90, %p91
      %s94 = sadd.s32 %s93, 1
      %p97 = scmp.eq.s32.totalorder %s17, 1
      %p98 = scmp.ne.s32.totalorder %s93, %s95
      %p99 = scmp.eq.s32.totalorder %s17, 0
      %p100 = por %p98, %p99
      %p101 = scmp.ne.s32.totalorder %s93, %s95
      %p102 = scmp.eq.s32.totalorder %s22, 1
      %p103 = por %p101, %p102
      %p104 = scmp.ne.s32.totalorder %s95, %s96
      %p105 = scmp.eq.s32.totalorder %s22, 0
      %p106 = por %p104, %p105
      %p107 = scmp.ne.s32.totalorder %s95, %s96
      %p108 = scmp.eq.s32.totalorder %s23, 1
      %p109 = por %p107, %p108
      %p111 = scmp.ne.s32.totalorder %s96, %s110
      %p112 = scmp.eq.s32.totalorder %s23, 0
      %p113 = por %p111, %p112
      %s114 = ssub.s32 %s17, %s24
      %p115 = scmp.eq.s32.totalorder %s114, 0
      %s117 = sadd.s32 %s116, 1
      %s118 = scalar_select %p115, %s116, %s117
      %p121 = pneg %p115
      %p122 = scmp.eq.s32.totalorder %s17, 1
      %p123 = por %p121, %p122
      %p124 = scmp.ne.s32.totalorder %s116, %s119
      %p125 = scmp.eq.s32.totalorder %s17, 0
      %p126 = por %p124, %p125
      %p127 = scmp.ne.s32.totalorder %s116, %s119
      %p128 = scmp.eq.s32.totalorder %s22, 1
      %p129 = por %p127, %p128
      %p130 = scmp.ne.s32.totalorder %s119, %s120
      %p131 = scmp.eq.s32.totalorder %s22, 0
      %p132 = por %p130, %p131
      %p133 = scmp.ne.s32.totalorder %s119, %s120
      %p134 = scmp.eq.s32.totalorder %s23, 1
      %p135 = por %p133, %p134
      %p137 = scmp.ne.s32.totalorder %s120, %s136
      %p138 = scmp.eq.s32.totalorder %s23, 0
      %p139 = por %p137, %p138
      %p140 = scmp.le.s32.totalorder 1, %s17
      %p141 = scmp.lt.s32.totalorder %s17, 3
      %p142 = pnand %p140, %p141
      %p143 = pneg %p142
      // Predicated region
      $region9: #{transformer_block.1} parent=5 // pred_check
        _
      $region10: #{transformer_block.1} parent=5 // pred_check_branch
        %145 = sbr.rel (%p142) target = $region12
      $region11: #{transformer_block.1} parent=5 // pred_region
        %s146 = ssub.s32 %s17, 1
        // Predicated region
        $region13: #{transformer_block.1} parent=11 // pred_check
          %p147 = pneg %p64
        $region14: #{transformer_block.1} parent=11 // pred_check_branch
          %149 = sbr.rel (%p147) target = $region16
        $region15: #{transformer_block.1} parent=11 // pred_region
          %s151 = ssub.s32 2560, 2560
          %152 = vsyncadd [#allocation6], %s151
          %s153 = sshll.u32 [#allocation5], 4
          %s154 = int_to_ptr.vmem [resolvable:$true] %s153
          %159 = dma.hbm_to_vmem [thread:$0]  %s1, 2560, %s154, [#allocation6], 128, 128, 8
        $region16: #{transformer_block.1} parent=11 // pred_fallthru
          _
        // Predicated region
        $region17: #{transformer_block.1} parent=11 // pred_check
          %p160 = pneg %p85
        $region18: #{transformer_block.1} parent=11 // pred_check_branch
          %162 = sbr.rel (%p160) target = $region20
        $region19: #{transformer_block.1} parent=11 // pred_region
          _
        $region20: #{transformer_block.1} parent=11 // pred_fallthru
          _
        // Predicated region
        $region21: #{transformer_block.1} parent=11 // pred_check
          %p163 = pneg %p106
        $region22: #{transformer_block.1} parent=11 // pred_check_branch
          %165 = sbr.rel (%p163) target = $region24
        $region23: #{transformer_block.1} parent=11 // pred_region
          %s167 = ssub.s32 512, 512
          %168 = vsyncadd [#allocation6], %s167
          %s169 = sshll.u32 [#allocation7], 4
          %s170 = int_to_ptr.vmem [resolvable:$true] %s169
          %175 = dma.hbm_to_vmem [thread:$0]  %s3, 512, %s170, [#allocation6], 128, 128, 8
        $region24: #{transformer_block.1} parent=11 // pred_fallthru
          _
      $region12: #{transformer_block.1} parent=5 // pred_fallthru
        _
      %p176 = scmp.lt.s32.totalorder %s17, 2
      // Predicated region
      $region25: #{transformer_block.1} parent=5 // pred_check
        %p177 = pneg %p176
      $region26: #{transformer_block.1} parent=5 // pred_check_branch
        %179 = sbr.rel (%p177) target = $region28
      $region27: #{transformer_block.1} parent=5 // pred_region
        // Predicated region
        $region29: #{transformer_block.1} parent=27 // pred_check
          %p180 = pneg %p37
        $region30: #{transformer_block.1} parent=27 // pred_check_branch
          %182 = sbr.rel (%p180) target = $region32
        $region31: #{transformer_block.1} parent=27 // pred_region
          %s183 = sand.u32 %s27, 1
          %s184 = scalar_lea.sflag [#allocation3], %s183
          %s185 = sand.u32 %s27, 1
          %s186 = smul.addr %s185, 8
          %s187 = scalar_lea.vmem [#allocation2], %s186
          %s189 = ssub.s32 128, 128
          %190 = vsyncadd %s184, %s189
          %s191 = smul.addr %s17, 128
          %s192 = scalar_lea.hbm %s0, %s191
          %s194 = sshll.u32 %s187, 4
          %s195 = int_to_ptr.vmem [resolvable:$true] %s194
          %197 = dma.hbm_to_vmem [thread:$0]  %s192, 128, %s195, %s184
        $region32: #{transformer_block.1} parent=27 // pred_fallthru
          _
      $region28: #{transformer_block.1} parent=5 // pred_fallthru
        _
      %p198 = scmp.le.s32.totalorder 1, %s17
      %p199 = scmp.lt.s32.totalorder %s17, 3
      %p200 = pnand %p198, %p199
      %p201 = pneg %p200
      // Predicated region
      $region33: #{transformer_block.1} parent=5 // pred_check
        _
      $region34: #{transformer_block.1} parent=5 // pred_check_branch
        %203 = sbr.rel (%p200) target = $region36
      $region35: #{transformer_block.1} parent=5 // pred_region
        %s204 = ssub.s32 %s17, 1
        %s205 = sand.u32 %s30, 1
        %s206 = scalar_lea.sflag [#allocation3], %s205
        %s207 = sand.u32 %s30, 1
        %s208 = smul.addr %s207, 8
        %s209 = scalar_lea.vmem [#allocation2], %s208
        // Predicated region
        $region37: #{transformer_block.1} parent=35 // pred_check
          %p210 = pneg %p43
        $region38: #{transformer_block.1} parent=35 // pred_check_branch
          %212 = sbr.rel (%p210) target = $region40
        $region39: #{transformer_block.1} parent=35 // pred_region
          %213 = dma.done %s206, 128
        $region40: #{transformer_block.1} parent=35 // pred_fallthru
          _
        // Predicated region
        $region41: #{transformer_block.1} parent=35 // pred_check
          %p214 = pneg %p64
        $region42: #{transformer_block.1} parent=35 // pred_check_branch
          %216 = sbr.rel (%p214) target = $region44
        $region43: #{transformer_block.1} parent=35 // pred_region
          %217 = dma.done [#allocation6], 2560
        $region44: #{transformer_block.1} parent=35 // pred_fallthru
          _
        // Predicated region
        $region45: #{transformer_block.1} parent=35 // pred_check
          %p218 = pneg %p106
        $region46: #{transformer_block.1} parent=35 // pred_check_branch
          %220 = sbr.rel (%p218) target = $region48
        $region47: #{transformer_block.1} parent=35 // pred_region
          %221 = dma.done [#allocation6], 512
        $region48: #{transformer_block.1} parent=35 // pred_fallthru
          _
        %s222 = sand.u32 %s30, 1
        %s223 = scalar_lea.sflag [#allocation3], %s222
        %s224 = sand.u32 %s30, 1
        %s225 = smul.addr %s224, 8
        %s226 = scalar_lea.vmem [#allocation2], %s225
        %p227 = pneg %p43
        %p228 = pneg %p40
        %p229 = pneg %p64
        %p230 = pneg %p61
        %p231 = pneg %p85
        %p232 = pneg %p82
        %p233 = pneg %p106
        %p234 = pneg %p103
        %p235 = pneg %p132
        %p236 = pneg %p129
        %s237 = sand.u32 %s119, 1
        %s238 = scalar_lea.sflag [#allocation4], %s237
        %s239 = sand.u32 %s119, 1
        %s240 = smul.addr %s239, 8
        %s241 = scalar_lea.vmem [#allocation8], %s240
        %v242 = vld [vmem:[%s209] sm:$0xff]
        %v243 = vld [vmem:[#allocation7] sm:$0xff]
        %v244 = vld [vmem:[#allocation7 + $0x8] sm:$0xff]
        %v245 = vld [vmem:[#allocation7 + $0x10] sm:$0xff]
        %v246 = vld [vmem:[#allocation7 + $0x18] sm:$0xff]
        %v247 = vld [vmem:[#allocation5] sm:$0xff]
        %v248 = vld [vmem:[#allocation5 + $0x8] sm:$0xff]
        %v249 = vld [vmem:[#allocation5 + $0x10] sm:$0xff]
        %v250 = vld [vmem:[#allocation5 + $0x18] sm:$0xff]
        %v251 = vld [vmem:[%s2] sm:$0x1]
        %v252 = vlaneseq
        %v253 = vshrl.u32 %v252, 7
        %v254 = vsub.s32 0, %v253
        %v255 = vrot.slane %v251, %v254
        %vm256 = vcmask 261120
        %v258 = vsel %vm256, %v242, 0
        %260 = vmatprep.subr.mxu0 0.0
        %261 = vmatpush1.msra.mxu0 %v247
        %262 = vmatprep.subr.mxu0 0.0
        %263 = vmatpush1.msra.mxu0 %v248
        %264 = vmatprep.subr.mxu0 0.0
        %265 = vmatpush1.msra.mxu0 %v249
        %266 = vmatprep.subr.mxu0 0.0
        %267 = vmatpush1.msra.mxu0 %v250
        %268 = vmatprep.subr.mxu0 0.0
        %269 = vmatpush1.msra.mxu0 0.0
        %270 = vmatprep.subr.mxu0 0.0
        %271 = vmatpush1.msra.mxu0 0.0
        %272 = vmatprep.subr.mxu0 0.0
        %273 = vmatpush1.msra.mxu0 0.0
        %274 = vmatprep.subr.mxu0 0.0
        %275 = vmatpush1.msra.mxu0 0.0
        %276 = vmatprep.subr.mxu0 0.0
        %277 = vmatpush1.msra.mxu0 0.0
        %278 = vmatprep.subr.mxu0 0.0
        %279 = vmatpush1.msra.mxu0 0.0
        %280 = vmatprep.subr.mxu0 0.0
        %281 = vmatpush1.msra.mxu0 0.0
        %282 = vmatprep.subr.mxu0 0.0
        %283 = vmatpush1.msra.mxu0 0.0
        %284 = vmatprep.subr.mxu0 0.0
        %285 = vmatpush1.msra.mxu0 0.0
        %286 = vmatprep.subr.mxu0 0.0
        %287 = vmatpush1.msra.mxu0 0.0
        %288 = vmatprep.subr.mxu0 0.0
        %289 = vmatpush1.msra.mxu0 0.0
        %290 = vmatprep.subr.mxu0 0.0
        %291 = vmatpush1.msra.mxu0 0.0
        %292 = vmatprep.subr.mxu0 0.0
        %293 = vmatpush1.msra.mxu0 0.0
        %294 = vmatprep.subr.mxu0 0.0
        %295 = vmatpush1.msra.mxu0 0.0
        %296 = vmatprep.subr.mxu0 0.0
        %297 = vmatpush1.msra.mxu0 0.0
        %298 = vmatprep.subr.mxu0 0.0
        %299 = vmatpush1.msra.mxu0 0.0
        %300 = vmatprep.subr.mxu0 0.0
        %301 = vmatpush1.msra.mxu0 0.0
        %302 = vmatprep.subr.mxu0 0.0
        %303 = vmatpush1.msra.mxu0 0.0
        %304 = vmatprep.subr.mxu0 0.0
        %305 = vmatpush1.msra.mxu0 0.0
        %306 = vmatprep.subr.mxu0 0.0
        %307 = vmatpush1.msra.mxu0 0.0
        %308 = vmatprep.subr.mxu0 0.0
        %309 = vmatpush1.msra.mxu0 0.0
        %310 = vmatprep.subr.mxu0 0.0
        %311 = vmatpush1.msra.mxu0 0.0
        %312 = vmatprep.subr.mxu0 0.0
        %313 = vmatpush1.msra.mxu0 0.0
        %314 = vmatprep.subr.mxu0 0.0
        %315 = vmatpush1.msra.mxu0 0.0
        %316 = vmatprep.subr.mxu0 0.0
        %317 = vmatpush1.msra.mxu0 0.0
        %318 = vmatprep.subr.mxu0 0.0
        %319 = vmatpush1.msra.mxu0 0.0
        %320 = vmatprep.subr.mxu0 0.0
        %321 = vmatpush1.msra.mxu0 0.0
        %322 = vmatprep.subr.mxu0 0.0
        %323 = vmatpush1.msra.mxu0 0.0
        %324 = vmatprep.mubr.f32.mxu0 0.0
        %325 = vmatmul.mubr.f32.gmra.mrb[0].mxu0 %v258
        %v326 = vpop.f32.mrb[0].mxu0
        %v327 = vadd.f32 %v255, %v326
        %v328 = vpop.f32.mrb[0].mxu0
        %329 = vdwg.mxu0
        %v330 = vmul.f32 %v327, %v243
        %v331 = vmul.f32 %v327, %v244
        %v332 = vmul.f32 %v327, %v245
        %v333 = vmul.f32 %v327, %v246
        %335 = vrot.lane.b32.xlu0 %v327, 96
        %v336 = vpop.permute.xlu0 %335
        %v338 = vsel %vm256, %v330, 0
        %v341 = vsel %vm256, %v331, 0
        %v344 = vsel %vm256, %v332, 0
        %v347 = vsel %vm256, %v333, 0
        %v349 = vsel %vm256, %v336, 0
        %351 = vmatprep.subr.mxu0 0.0
        %352 = vmatpush1.xpose.msra.mxu0 %v349
        %353 = vmatprep.subr.mxu0 0.0
        %354 = vmatpush1.xpose.msra.mxu0 0.0
        %355 = vmatprep.subr.mxu0 0.0
        %356 = vmatpush1.xpose.msra.mxu0 0.0
        %357 = vmatprep.subr.mxu0 0.0
        %358 = vmatpush1.xpose.msra.mxu0 0.0
        %359 = vmatprep.subr.mxu0 0.0
        %360 = vmatpush1.xpose.msra.mxu0 0.0
        %361 = vmatprep.subr.mxu0 0.0
        %362 = vmatpush1.xpose.msra.mxu0 0.0
        %363 = vmatprep.subr.mxu0 0.0
        %364 = vmatpush1.xpose.msra.mxu0 0.0
        %365 = vmatprep.subr.mxu0 0.0
        %366 = vmatpush1.xpose.msra.mxu0 0.0
        %367 = vmatprep.subr.mxu0 0.0
        %368 = vmatpush1.xpose.msra.mxu0 0.0
        %369 = vmatprep.subr.mxu0 0.0
        %370 = vmatpush1.xpose.msra.mxu0 0.0
        %371 = vmatprep.subr.mxu0 0.0
        %372 = vmatpush1.xpose.msra.mxu0 0.0
        %373 = vmatprep.subr.mxu0 0.0
        %374 = vmatpush1.xpose.msra.mxu0 0.0
        %375 = vmatprep.subr.mxu0 0.0
        %376 = vmatpush1.xpose.msra.mxu0 0.0
        %377 = vmatprep.subr.mxu0 0.0
        %378 = vmatpush1.xpose.msra.mxu0 0.0
        %379 = vmatprep.subr.mxu0 0.0
        %380 = vmatpush1.xpose.msra.mxu0 0.0
        %381 = vmatprep.subr.mxu0 0.0
        %382 = vmatpush1.xpose.msra.mxu0 0.0
        %383 = vmatprep.subr.mxu0 0.0
        %384 = vmatpush1.xpose.msra.mxu0 0.0
        %385 = vmatprep.subr.mxu0 0.0
        %386 = vmatpush1.xpose.msra.mxu0 0.0
        %387 = vmatprep.subr.mxu0 0.0
        %388 = vmatpush1.xpose.msra.mxu0 0.0
        %389 = vmatprep.subr.mxu0 0.0
        %390 = vmatpush1.xpose.msra.mxu0 0.0
        %391 = vmatprep.subr.mxu0 0.0
        %392 = vmatpush1.xpose.msra.mxu0 0.0
        %393 = vmatprep.subr.mxu0 0.0
        %394 = vmatpush1.xpose.msra.mxu0 0.0
        %395 = vmatprep.subr.mxu0 0.0
        %396 = vmatpush1.xpose.msra.mxu0 0.0
        %397 = vmatprep.subr.mxu0 0.0
        %398 = vmatpush1.xpose.msra.mxu0 0.0
        %399 = vmatprep.subr.mxu0 0.0
        %400 = vmatpush1.xpose.msra.mxu0 0.0
        %401 = vmatprep.subr.mxu0 0.0
        %402 = vmatpush1.xpose.msra.mxu0 0.0
        %403 = vmatprep.subr.mxu0 0.0
        %404 = vmatpush1.xpose.msra.mxu0 0.0
        %405 = vmatprep.subr.mxu0 0.0
        %406 = vmatpush1.xpose.msra.mxu0 0.0
        %407 = vmatprep.subr.mxu0 0.0
        %408 = vmatpush1.xpose.msra.mxu0 0.0
        %409 = vmatprep.subr.mxu0 0.0
        %410 = vmatpush1.xpose.msra.mxu0 0.0
        %411 = vmatprep.subr.mxu0 0.0
        %412 = vmatpush1.xpose.msra.mxu0 0.0
        %413 = vmatprep.subr.mxu0 0.0
        %414 = vmatpush1.xpose.msra.mxu0 0.0
        %415 = vmatprep.mubr.f32.mxu0 0.0
        %416 = vmatmul.mubr.f32.gmra.mrb[0].mxu0 %v338
        %v417 = vpop.f32.mrb[0].mxu0
        %v418 = vadd.f32 0.0, %v417
        %v419 = vpop.f32.mrb[0].mxu0
        %420 = vmatprep.mubr.f32.mxu0 0.0
        %421 = vmatmul.mubr.f32.gmra.mrb[0].mxu0 %v341
        %v422 = vpop.f32.mrb[0].mxu0
        %v423 = vadd.f32 0.0, %v422
        %v424 = vpop.f32.mrb[0].mxu0
        %425 = vmatprep.mubr.f32.mxu0 0.0
        %426 = vmatmul.mubr.f32.gmra.mrb[0].mxu0 %v344
        %v427 = vpop.f32.mrb[0].mxu0
        %v428 = vadd.f32 0.0, %v427
        %v429 = vpop.f32.mrb[0].mxu0
        %430 = vmatprep.mubr.f32.mxu0 0.0
        %431 = vmatmul.mubr.f32.gmra.mrb[0].mxu0 %v347
        %v432 = vpop.f32.mrb[0].mxu0
        %v433 = vadd.f32 0.0, %v432
        %v434 = vpop.f32.mrb[0].mxu0
        %435 = vdwg.mxu0
        %vm436 = vcmask 64512
        %v437 = vsel %vm436, %v418, -inf
        %438 = vmax.xlane.f32.xlu0 %v437
        %v439 = vpop.xlane.xlu0 %438
        %v440 = vsel %vm436, %v423, -inf
        %441 = vmax.xlane.f32.xlu0 %v440
        %v442 = vpop.xlane.xlu0 %441
        %v443 = vsel %vm436, %v428, -inf
        %444 = vmax.xlane.f32.xlu0 %v443
        %v445 = vpop.xlane.xlu0 %444
        %v446 = vsel %vm436, %v433, -inf
        %447 = vmax.xlane.f32.xlu0 %v446
        %v448 = vpop.xlane.xlu0 %447
        %v449 = vsub.f32 %v418, %v439
        %v450 = vsub.f32 %v423, %v442
        %v451 = vsub.f32 %v428, %v445
        %v452 = vsub.f32 %v433, %v448
        %v453 = vmul.f32 %v449, 1.442695
        %v454 = vpow.pop %v453
        %v455 = vmul.f32 %v450, 1.442695
        %v456 = vpow.pop %v455
        %v457 = vmul.f32 %v451, 1.442695
        %v458 = vpow.pop %v457
        %v459 = vmul.f32 %v452, 1.442695
        %v460 = vpow.pop %v459
        %v461 = vsel %vm436, %v454, 0.0
        %462 = vadd.xlane.f32.xlu0 %v461
        %v463 = vpop.xlane.xlu0 %462
        %v464 = vsel %vm436, %v456, 0.0
        %465 = vadd.xlane.f32.xlu0 %v464
        %v466 = vpop.xlane.xlu0 %465
        %v467 = vsel %vm436, %v458, 0.0
        %468 = vadd.xlane.f32.xlu0 %v467
        %v469 = vpop.xlane.xlu0 %468
        %v470 = vsel %vm436, %v460, 0.0
        %471 = vadd.xlane.f32.xlu0 %v470
        %v472 = vpop.xlane.xlu0 %471
        %v473 = vrcp.pop %v463
        %v474 = vrcp.pop %v466
        %v475 = vrcp.pop %v469
        %v476 = vrcp.pop %v472
        %v477 = vmul.f32 %v454, %v473
        %v478 = vmul.f32 %v456, %v474
        %v479 = vmul.f32 %v458, %v475
        %v480 = vmul.f32 %v460, %v476
        %481 = vrot.lane.b32.xlu0 %v327, 64
        %v482 = vpop.permute.xlu0 %481
        %v485 = vsel %vm436, %v477, 0
        %v488 = vsel %vm436, %v478, 0
        %v491 = vsel %vm436, %v479, 0
        %v494 = vsel %vm436, %v480, 0
        %496 = vmatprep.subr.mxu0 0.0
        %497 = vmatpush1.msra.mxu0 %v482
        %498 = vmatprep.subr.mxu0 0.0
        %499 = vmatpush1.msra.mxu0 0.0
        %500 = vmatprep.subr.mxu0 0.0
        %501 = vmatpush1.msra.mxu0 0.0
        %502 = vmatprep.subr.mxu0 0.0
        %503 = vmatpush1.msra.mxu0 0.0
        %504 = vmatprep.subr.mxu0 0.0
        %505 = vmatpush1.msra.mxu0 0.0
        %506 = vmatprep.subr.mxu0 0.0
        %507 = vmatpush1.msra.mxu0 0.0
        %508 = vmatprep.subr.mxu0 0.0
        %509 = vmatpush1.msra.mxu0 0.0
        %510 = vmatprep.subr.mxu0 0.0
        %511 = vmatpush1.msra.mxu0 0.0
        %512 = vmatprep.subr.mxu0 0.0
        %513 = vmatpush1.msra.mxu0 0.0
        %514 = vmatprep.subr.mxu0 0.0
        %515 = vmatpush1.msra.mxu0 0.0
        %516 = vmatprep.subr.mxu0 0.0
        %517 = vmatpush1.msra.mxu0 0.0
        %518 = vmatprep.subr.mxu0 0.0
        %519 = vmatpush1.msra.mxu0 0.0
        %520 = vmatprep.subr.mxu0 0.0
        %521 = vmatpush1.msra.mxu0 0.0
        %522 = vmatprep.subr.mxu0 0.0
        %523 = vmatpush1.msra.mxu0 0.0
        %524 = vmatprep.subr.mxu0 0.0
        %525 = vmatpush1.msra.mxu0 0.0
        %526 = vmatprep.subr.mxu0 0.0
        %527 = vmatpush1.msra.mxu0 0.0
        %528 = vmatprep.subr.mxu0 0.0
        %529 = vmatpush1.msra.mxu0 0.0
        %530 = vmatprep.subr.mxu0 0.0
        %531 = vmatpush1.msra.mxu0 0.0
        %532 = vmatprep.subr.mxu0 0.0
        %533 = vmatpush1.msra.mxu0 0.0
        %534 = vmatprep.subr.mxu0 0.0
        %535 = vmatpush1.msra.mxu0 0.0
        %536 = vmatprep.subr.mxu0 0.0
        %537 = vmatpush1.msra.mxu0 0.0
        %538 = vmatprep.subr.mxu0 0.0
        %539 = vmatpush1.msra.mxu0 0.0
        %540 = vmatprep.subr.mxu0 0.0
        %541 = vmatpush1.msra.mxu0 0.0
        %542 = vmatprep.subr.mxu0 0.0
        %543 = vmatpush1.msra.mxu0 0.0
        %544 = vmatprep.subr.mxu0 0.0
        %545 = vmatpush1.msra.mxu0 0.0
        %546 = vmatprep.subr.mxu0 0.0
        %547 = vmatpush1.msra.mxu0 0.0
        %548 = vmatprep.subr.mxu0 0.0
        %549 = vmatpush1.msra.mxu0 0.0
        %550 = vmatprep.subr.mxu0 0.0
        %551 = vmatpush1.msra.mxu0 0.0
        %552 = vmatprep.subr.mxu0 0.0
        %553 = vmatpush1.msra.mxu0 0.0
        %554 = vmatprep.subr.mxu0 0.0
        %555 = vmatpush1.msra.mxu0 0.0
        %556 = vmatprep.subr.mxu0 0.0
        %557 = vmatpush1.msra.mxu0 0.0
        %558 = vmatprep.subr.mxu0 0.0
        %559 = vmatpush1.msra.mxu0 0.0
        %560 = vmatprep.mubr.f32.mxu0 0.0
        %561 = vmatmul.mubr.f32.gmra.mrb[0].mxu0 %v485
        %v562 = vpop.f32.mrb[0].mxu0
        %v563 = vadd.f32 0.0, %v562
        %v564 = vpop.f32.mrb[0].mxu0
        %565 = vmatprep.mubr.f32.mxu0 0.0
        %566 = vmatmul.mubr.f32.gmra.mrb[0].mxu0 %v488
        %v567 = vpop.f32.mrb[0].mxu0
        %v568 = vadd.f32 0.0, %v567
        %v569 = vpop.f32.mrb[0].mxu0
        %570 = vmatprep.mubr.f32.mxu0 0.0
        %571 = vmatmul.mubr.f32.gmra.mrb[0].mxu0 %v491
        %v572 = vpop.f32.mrb[0].mxu0
        %v573 = vadd.f32 0.0, %v572
        %v574 = vpop.f32.mrb[0].mxu0
        %575 = vmatprep.mubr.f32.mxu0 0.0
        %576 = vmatmul.mubr.f32.gmra.mrb[0].mxu0 %v494
        %v577 = vpop.f32.mrb[0].mxu0
        %v578 = vadd.f32 0.0, %v577
        %v579 = vpop.f32.mrb[0].mxu0
        %580 = vdwg.mxu0
        %v581 = vmul.f32 %v563, %v243
        %v582 = vmul.f32 %v568, %v244
        %v583 = vmul.f32 %v573, %v245
        %v584 = vmul.f32 %v578, %v246
        %v585 = vsel %vm256, %v581, 0.0
        %v586 = vsel %vm256, %v582, 0.0
        %v587 = vadd.f32 %v585, %v586
        %v588 = vsel %vm256, %v583, 0.0
        %v589 = vadd.f32 %v587, %v588
        %v590 = vsel %vm256, %v584, 0.0
        %v591 = vadd.f32 %v589, %v590
        %v592 = vld [vmem:[#allocation5 + $0x20] sm:$0xff]
        %v593 = vld [vmem:[#allocation5 + $0x28] sm:$0xff]
        %v594 = vld [vmem:[#allocation5 + $0x30] sm:$0xff]
        %v595 = vld [vmem:[#allocation5 + $0x38] sm:$0xff]
        %v596 = vld [vmem:[%s2 + $0x1] sm:$0x1]
        %v597 = vlaneseq
        %v598 = vshrl.u32 %v597, 7
        %v599 = vsub.s32 0, %v598
        %v600 = vrot.slane %v596, %v599
        %v602 = vsel %vm256, %v591, 0
        %604 = vmatprep.subr.mxu0 0.0
        %605 = vmatpush1.msra.mxu0 %v592
        %606 = vmatprep.subr.mxu0 0.0
        %607 = vmatpush1.msra.mxu0 %v593
        %608 = vmatprep.subr.mxu0 0.0
        %609 = vmatpush1.msra.mxu0 %v594
        %610 = vmatprep.subr.mxu0 0.0
        %611 = vmatpush1.msra.mxu0 %v595
        %612 = vmatprep.subr.mxu0 0.0
        %613 = vmatpush1.msra.mxu0 0.0
        %614 = vmatprep.subr.mxu0 0.0
        %615 = vmatpush1.msra.mxu0 0.0
        %616 = vmatprep.subr.mxu0 0.0
        %617 = vmatpush1.msra.mxu0 0.0
        %618 = vmatprep.subr.mxu0 0.0
        %619 = vmatpush1.msra.mxu0 0.0
        %620 = vmatprep.subr.mxu0 0.0
        %621 = vmatpush1.msra.mxu0 0.0
        %622 = vmatprep.subr.mxu0 0.0
        %623 = vmatpush1.msra.mxu0 0.0
        %624 = vmatprep.subr.mxu0 0.0
        %625 = vmatpush1.msra.mxu0 0.0
        %626 = vmatprep.subr.mxu0 0.0
        %627 = vmatpush1.msra.mxu0 0.0
        %628 = vmatprep.subr.mxu0 0.0
        %629 = vmatpush1.msra.mxu0 0.0
        %630 = vmatprep.subr.mxu0 0.0
        %631 = vmatpush1.msra.mxu0 0.0
        %632 = vmatprep.subr.mxu0 0.0
        %633 = vmatpush1.msra.mxu0 0.0
        %634 = vmatprep.subr.mxu0 0.0
        %635 = vmatpush1.msra.mxu0 0.0
        %636 = vmatprep.subr.mxu0 0.0
        %637 = vmatpush1.msra.mxu0 0.0
        %638 = vmatprep.subr.mxu0 0.0
        %639 = vmatpush1.msra.mxu0 0.0
        %640 = vmatprep.subr.mxu0 0.0
        %641 = vmatpush1.msra.mxu0 0.0
        %642 = vmatprep.subr.mxu0 0.0
        %643 = vmatpush1.msra.mxu0 0.0
        %644 = vmatprep.subr.mxu0 0.0
        %645 = vmatpush1.msra.mxu0 0.0
        %646 = vmatprep.subr.mxu0 0.0
        %647 = vmatpush1.msra.mxu0 0.0
        %648 = vmatprep.subr.mxu0 0.0
        %649 = vmatpush1.msra.mxu0 0.0
        %650 = vmatprep.subr.mxu0 0.0
        %651 = vmatpush1.msra.mxu0 0.0
        %652 = vmatprep.subr.mxu0 0.0
        %653 = vmatpush1.msra.mxu0 0.0
        %654 = vmatprep.subr.mxu0 0.0
        %655 = vmatpush1.msra.mxu0 0.0
        %656 = vmatprep.subr.mxu0 0.0
        %657 = vmatpush1.msra.mxu0 0.0
        %658 = vmatprep.subr.mxu0 0.0
        %659 = vmatpush1.msra.mxu0 0.0
        %660 = vmatprep.subr.mxu0 0.0
        %661 = vmatpush1.msra.mxu0 0.0
        %662 = vmatprep.subr.mxu0 0.0
        %663 = vmatpush1.msra.mxu0 0.0
        %664 = vmatprep.subr.mxu0 0.0
        %665 = vmatpush1.msra.mxu0 0.0
        %666 = vmatprep.subr.mxu0 0.0
        %667 = vmatpush1.msra.mxu0 0.0
        %668 = vmatprep.mubr.f32.mxu0 0.0
        %669 = vmatmul.mubr.f32.gmra.mrb[0].mxu0 %v602
        %v670 = vpop.f32.mrb[0].mxu0
        %v671 = vadd.f32 %v600, %v670
        %v672 = vpop.f32.mrb[0].mxu0
        %673 = vdwg.mxu0
        %v674 = vadd.f32 %v242, %v671
        %v675 = vld [vmem:[%s2 + $0x2] sm:$0x1]
        %v676 = vld [vmem:[%s2 + $0x3] sm:$0x1]
        %v677 = vsel %vm256, %v674, 0.0
        %678 = vadd.xlane.f32.xlu0 %v677
        %v679 = vpop.xlane.xlu0 %678
        %v680 = vrcp.pop 32.0
        %v681 = vmul.f32 %v679, %v680
        %v682 = vsub.f32 %v674, %v681
        %v683 = vmul.f32 %v682, %v682
        %v684 = vsel %vm256, %v683, 0.0
        %685 = vadd.xlane.f32.xlu0 %v684
        %v686 = vpop.xlane.xlu0 %685
        %v687 = vmul.f32 %v686, %v680
        %v688 = vadd.f32 %v687, 1e-05
        %v689 = vrsqrt.pop %v688
        %v690 = vmul.f32 %v682, %v689
        %v691 = vlaneseq
        %v692 = vshrl.u32 %v691, 7
        %v693 = vsub.s32 0, %v692
        %v694 = vrot.slane %v675, %v693
        %v695 = vmul.f32 %v690, %v694
        %v696 = vlaneseq
        %v697 = vshrl.u32 %v696, 7
        %v698 = vsub.s32 0, %v697
        %v699 = vrot.slane %v676, %v698
        %v700 = vadd.f32 %v695, %v699
        %v701 = vld [vmem:[#allocation5 + $0x40] sm:$0xff]
        %v702 = vld [vmem:[#allocation5 + $0x48] sm:$0xff]
        %v703 = vld [vmem:[#allocation5 + $0x50] sm:$0xff]
        %v704 = vld [vmem:[#allocation5 + $0x58] sm:$0xff]
        %v705 = vld [vmem:[%s2 + $0x4] sm:$0x1]
        %v706 = vlaneseq
        %v707 = vshrl.u32 %v706, 7
        %v708 = vsub.s32 0, %v707
        %v709 = vrot.slane %v705, %v708
        %v711 = vsel %vm256, %v700, 0
        %713 = vmatprep.subr.mxu0 0.0
        %714 = vmatpush1.msra.mxu0 %v701
        %715 = vmatprep.subr.mxu0 0.0
        %716 = vmatpush1.msra.mxu0 %v702
        %717 = vmatprep.subr.mxu0 0.0
        %718 = vmatpush1.msra.mxu0 %v703
        %719 = vmatprep.subr.mxu0 0.0
        %720 = vmatpush1.msra.mxu0 %v704
        %721 = vmatprep.subr.mxu0 0.0
        %722 = vmatpush1.msra.mxu0 0.0
        %723 = vmatprep.subr.mxu0 0.0
        %724 = vmatpush1.msra.mxu0 0.0
        %725 = vmatprep.subr.mxu0 0.0
        %726 = vmatpush1.msra.mxu0 0.0
        %727 = vmatprep.subr.mxu0 0.0
        %728 = vmatpush1.msra.mxu0 0.0
        %729 = vmatprep.subr.mxu0 0.0
        %730 = vmatpush1.msra.mxu0 0.0
        %731 = vmatprep.subr.mxu0 0.0
        %732 = vmatpush1.msra.mxu0 0.0
        %733 = vmatprep.subr.mxu0 0.0
        %734 = vmatpush1.msra.mxu0 0.0
        %735 = vmatprep.subr.mxu0 0.0
        %736 = vmatpush1.msra.mxu0 0.0
        %737 = vmatprep.subr.mxu0 0.0
        %738 = vmatpush1.msra.mxu0 0.0
        %739 = vmatprep.subr.mxu0 0.0
        %740 = vmatpush1.msra.mxu0 0.0
        %741 = vmatprep.subr.mxu0 0.0
        %742 = vmatpush1.msra.mxu0 0.0
        %743 = vmatprep.subr.mxu0 0.0
        %744 = vmatpush1.msra.mxu0 0.0
        %745 = vmatprep.subr.mxu0 0.0
        %746 = vmatpush1.msra.mxu0 0.0
        %747 = vmatprep.subr.mxu0 0.0
        %748 = vmatpush1.msra.mxu0 0.0
        %749 = vmatprep.subr.mxu0 0.0
        %750 = vmatpush1.msra.mxu0 0.0
        %751 = vmatprep.subr.mxu0 0.0
        %752 = vmatpush1.msra.mxu0 0.0
        %753 = vmatprep.subr.mxu0 0.0
        %754 = vmatpush1.msra.mxu0 0.0
        %755 = vmatprep.subr.mxu0 0.0
        %756 = vmatpush1.msra.mxu0 0.0
        %757 = vmatprep.subr.mxu0 0.0
        %758 = vmatpush1.msra.mxu0 0.0
        %759 = vmatprep.subr.mxu0 0.0
        %760 = vmatpush1.msra.mxu0 0.0
        %761 = vmatprep.subr.mxu0 0.0
        %762 = vmatpush1.msra.mxu0 0.0
        %763 = vmatprep.subr.mxu0 0.0
        %764 = vmatpush1.msra.mxu0 0.0
        %765 = vmatprep.subr.mxu0 0.0
        %766 = vmatpush1.msra.mxu0 0.0
        %767 = vmatprep.subr.mxu0 0.0
        %768 = vmatpush1.msra.mxu0 0.0
        %769 = vmatprep.subr.mxu0 0.0
        %770 = vmatpush1.msra.mxu0 0.0
        %771 = vmatprep.subr.mxu0 0.0
        %772 = vmatpush1.msra.mxu0 0.0
        %773 = vmatprep.subr.mxu0 0.0
        %774 = vmatpush1.msra.mxu0 0.0
        %775 = vmatprep.subr.mxu0 0.0
        %776 = vmatpush1.msra.mxu0 0.0
        %777 = vmatprep.mubr.f32.mxu0 0.0
        %778 = vmatmul.mubr.f32.gmra.mrb[0].mxu0 %v711
        %v779 = vpop.f32.mrb[0].mxu0
        %v780 = vadd.f32 %v709, %v779
        %v781 = vpop.f32.mrb[0].mxu0
        %782 = vdwg.mxu0
        %v783 = vmax.f32 %v780, 0.0
        %v784 = vld [vmem:[#allocation5 + $0x60] sm:$0xff]
        %v785 = vld [vmem:[#allocation5 + $0x68] sm:$0xff]
        %v786 = vld [vmem:[#allocation5 + $0x70] sm:$0xff]
        %v787 = vld [vmem:[#allocation5 + $0x78] sm:$0xff]
        %v788 = vld [vmem:[#allocation5 + $0x80] sm:$0xff]
        %v789 = vld [vmem:[#allocation5 + $0x88] sm:$0xff]
        %v790 = vld [vmem:[#allocation5 + $0x90] sm:$0xff]
        %v791 = vld [vmem:[#allocation5 + $0x98] sm:$0xff]
        %v792 = vld [vmem:[%s2 + $0x5] sm:$0x1]
        %v793 = vlaneseq
        %v794 = vshrl.u32 %v793, 7
        %v795 = vsub.s32 0, %v794
        %v796 = vrot.slane %v792, %v795
        %vm797 = vcmask 523264
        %v799 = vsel %vm797, %v783, 0
        %801 = vmatprep.subr.mxu0 0.0
        %802 = vmatpush1.msra.mxu0 %v784
        %803 = vmatprep.subr.mxu0 0.0
        %804 = vmatpush1.msra.mxu0 %v785
        %805 = vmatprep.subr.mxu0 0.0
        %806 = vmatpush1.msra.mxu0 %v786
        %807 = vmatprep.subr.mxu0 0.0
        %808 = vmatpush1.msra.mxu0 %v787
        %809 = vmatprep.subr.mxu0 0.0
        %810 = vmatpush1.msra.mxu0 %v788
        %811 = vmatprep.subr.mxu0 0.0
        %812 = vmatpush1.msra.mxu0 %v789
        %813 = vmatprep.subr.mxu0 0.0
        %814 = vmatpush1.msra.mxu0 %v790
        %815 = vmatprep.subr.mxu0 0.0
        %816 = vmatpush1.msra.mxu0 %v791
        %817 = vmatprep.subr.mxu0 0.0
        %818 = vmatpush1.msra.mxu0 0.0
        %819 = vmatprep.subr.mxu0 0.0
        %820 = vmatpush1.msra.mxu0 0.0
        %821 = vmatprep.subr.mxu0 0.0
        %822 = vmatpush1.msra.mxu0 0.0
        %823 = vmatprep.subr.mxu0 0.0
        %824 = vmatpush1.msra.mxu0 0.0
        %825 = vmatprep.subr.mxu0 0.0
        %826 = vmatpush1.msra.mxu0 0.0
        %827 = vmatprep.subr.mxu0 0.0
        %828 = vmatpush1.msra.mxu0 0.0
        %829 = vmatprep.subr.mxu0 0.0
        %830 = vmatpush1.msra.mxu0 0.0
        %831 = vmatprep.subr.mxu0 0.0
        %832 = vmatpush1.msra.mxu0 0.0
        %833 = vmatprep.subr.mxu0 0.0
        %834 = vmatpush1.msra.mxu0 0.0
        %835 = vmatprep.subr.mxu0 0.0
        %836 = vmatpush1.msra.mxu0 0.0
        %837 = vmatprep.subr.mxu0 0.0
        %838 = vmatpush1.msra.mxu0 0.0
        %839 = vmatprep.subr.mxu0 0.0
        %840 = vmatpush1.msra.mxu0 0.0
        %841 = vmatprep.subr.mxu0 0.0
        %842 = vmatpush1.msra.mxu0 0.0
        %843 = vmatprep.subr.mxu0 0.0
        %844 = vmatpush1.msra.mxu0 0.0
        %845 = vmatprep.subr.mxu0 0.0
        %846 = vmatpush1.msra.mxu0 0.0
        %847 = vmatprep.subr.mxu0 0.0
        %848 = vmatpush1.msra.mxu0 0.0
        %849 = vmatprep.subr.mxu0 0.0
        %850 = vmatpush1.msra.mxu0 0.0
        %851 = vmatprep.subr.mxu0 0.0
        %852 = vmatpush1.msra.mxu0 0.0
        %853 = vmatprep.subr.mxu0 0.0
        %854 = vmatpush1.msra.mxu0 0.0
        %855 = vmatprep.subr.mxu0 0.0
        %856 = vmatpush1.msra.mxu0 0.0
        %857 = vmatprep.subr.mxu0 0.0
        %858 = vmatpush1.msra.mxu0 0.0
        %859 = vmatprep.subr.mxu0 0.0
        %860 = vmatpush1.msra.mxu0 0.0
        %861 = vmatprep.subr.mxu0 0.0
        %862 = vmatpush1.msra.mxu0 0.0
        %863 = vmatprep.subr.mxu0 0.0
        %864 = vmatpush1.msra.mxu0 0.0
        %865 = vmatprep.mubr.f32.mxu0 0.0
        %866 = vmatmul.mubr.f32.gmra.mrb[0].mxu0 %v799
        %v867 = vpop.f32.mrb[0].mxu0
        %v868 = vadd.f32 %v796, %v867
        %v869 = vpop.f32.mrb[0].mxu0
        %870 = vdwg.mxu0
        %v871 = vadd.f32 %v700, %v868
        %v872 = vld [vmem:[%s2 + $0x6] sm:$0x1]
        %v873 = vld [vmem:[%s2 + $0x7] sm:$0x1]
        %v874 = vsel %vm256, %v871, 0.0
        %875 = vadd.xlane.f32.xlu0 %v874
        %v876 = vpop.xlane.xlu0 %875
        %v877 = vmul.f32 %v876, %v680
        %v878 = vsub.f32 %v871, %v877
        %v879 = vmul.f32 %v878, %v878
        %v880 = vsel %vm256, %v879, 0.0
        %881 = vadd.xlane.f32.xlu0 %v880
        %v882 = vpop.xlane.xlu0 %881
        %v883 = vmul.f32 %v882, %v680
        %v884 = vadd.f32 %v883, 1e-05
        %v885 = vrsqrt.pop %v884
        %v886 = vmul.f32 %v878, %v885
        %v887 = vlaneseq
        %v888 = vshrl.u32 %v887, 7
        %v889 = vsub.s32 0, %v888
        %v890 = vrot.slane %v872, %v889
        %v891 = vmul.f32 %v886, %v890
        %v892 = vlaneseq
        %v893 = vshrl.u32 %v892, 7
        %v894 = vsub.s32 0, %v893
        %v895 = vrot.slane %v873, %v894
        %v896 = vadd.f32 %v891, %v895
        %897 = vst.msk [vmem:[%s241] sm:$0xff] %vm256, %v896
        %s898 = sand.u32 %s119, 1
        %s899 = scalar_lea.sflag [#allocation4], %s898
        %s900 = sand.u32 %s119, 1
        %s901 = smul.addr %s900, 8
        %s902 = scalar_lea.vmem [#allocation8], %s901
        // Predicated region
        $region49: #{transformer_block.1} parent=35 // pred_check
          %p903 = pneg %p129
        $region50: #{transformer_block.1} parent=35 // pred_check_branch
          %905 = sbr.rel (%p903) target = $region52
        $region51: #{transformer_block.1} parent=35 // pred_region
          %s907 = ssub.s32 128, 128
          %908 = vsyncadd %s899, %s907
          %s909 = smul.addr %s22, 128
          %s910 = scalar_lea.hbm %s4, %s909
          %s912 = sshll.u32 %s902, 4
          %s913 = int_to_ptr.vmem [resolvable:$true] %s912
          %915 = dma.vmem_to_hbm [thread:$0]  %s913, 128, %s910, %s899
        $region52: #{transformer_block.1} parent=35 // pred_fallthru
          _
      $region36: #{transformer_block.1} parent=5 // pred_fallthru
        _
      %p916 = scmp.le.s32.totalorder 2, %s17
      // Predicated region
      $region53: #{transformer_block.1} parent=5 // pred_check
        %p917 = pneg %p916
      $region54: #{transformer_block.1} parent=5 // pred_check_branch
        %919 = sbr.rel (%p917) target = $region56
      $region55: #{transformer_block.1} parent=5 // pred_region
        %s920 = ssub.s32 %s17, 2
        // Predicated region
        $region57: #{transformer_block.1} parent=55 // pred_check
          %p921 = pneg %p135
        $region58: #{transformer_block.1} parent=55 // pred_check_branch
          %923 = sbr.rel (%p921) target = $region60
        $region59: #{transformer_block.1} parent=55 // pred_region
          %s924 = sand.u32 %s120, 1
          %s925 = scalar_lea.sflag [#allocation4], %s924
          %s926 = sand.u32 %s120, 1
          %s927 = smul.addr %s926, 8
          %s928 = scalar_lea.vmem [#allocation8], %s927
          %929 = dma.done %s925, 128
        $region60: #{transformer_block.1} parent=55 // pred_fallthru
          _
      $region56: #{transformer_block.1} parent=5 // pred_fallthru
        _
    $region6: #{transformer_block.1} parent=1 // loop_footer
      %s21 = sadd.s32 1, %s17
    $region7: #{transformer_block.1} parent=1 // loop_footer_branch
      %16 = sbr.rel target = $region3
    $region8: #{transformer_block.1} parent=1 // loop_exit
      _
    %930 = vsyncpa [#allocation3], 1
    %s931 = scalar_lea.sflag [#allocation3], 1
    %932 = vsyncpa %s931, 1
    %933 = vsyncpa [#allocation6], 1
    %934 = vsyncpa [#allocation4], 1
    %s935 = scalar_lea.sflag [#allocation4], 1
    %936 = vsyncpa %s935, 1

</llo_original>
